<compile_context>
chip_gen: v6e
topology: v6e:2x2x1
jax: 0.10.0
libtpu: 0.0.40
codegen_flags: <defaults>
</compile_context>

<pallas_src>
import functools

import jax
import jax.numpy as jnp
import numpy as np
from jax.experimental import pallas as pl
from jax.experimental.pallas import tpu as pltpu


def disentangler_kernel(w9_ref, masks_ref, bn_ref, x_ref,
                        fgbg_ref, ccam_ref,
                        acc_scr, s1_scr, s2_scr,
                        *, N, C, H, W, eps, inference):
    HW = H * W
    phase = pl.program_id(0)
    n = pl.program_id(1)

    # ---- init persistent BN-stat scratch on the very first grid step ----------
    @pl.when(jnp.logical_and(phase == 0, n == 0))
    def _init_stats():
        s1_scr[...] = jnp.zeros_like(s1_scr)
        s2_scr[...] = jnp.zeros_like(s2_scr)

    # ---- phase 0: conv pre-activation for sample n + BN partial sums ----------
    @pl.when(phase == 0)
    def _conv_phase():
        x_n = x_ref[0]                                            # (C, HW)
        # One MXU contraction over channels for all 9 taps of this sample.
        taps = jnp.dot(w9_ref[...], x_n,
                       preferred_element_type=jnp.float32)        # (9, HW)
        masks = masks_ref[...]                                    # (8, HW), hoisted

        acc = taps[4:5, :]                                        # center tap, no mask
        mi = 0
        for ky in range(3):
            for kx in range(3):
                dy, dx = ky - 1, kx - 1
                if dy == 0 and dx == 0:
                    continue
                t = ky * 3 + kx
                # acc[p] += taps[t, p + dy*W + dx]  ==  roll(taps[t], -(dy*W+dx))[p]
                shift = (-(dy * W + dx)) % HW
                rolled = pltpu.roll(taps[t:t + 1, :], shift, 1)   # XLU rotate
                acc = acc + rolled * masks[mi:mi + 1, :]          # edge mask (VPU)
                mi += 1

        acc_scr[pl.ds(n, 1), :] = acc                             # keep for phase 1
        s1_scr[...] += jnp.sum(acc, keepdims=True)                # (1, 1)
        s2_scr[...] += jnp.sum(acc * acc, keepdims=True)          # (1, 1)

    # ---- phase 1: BN (batch stats) + sigmoid + fg/bg contraction --------------
    @pl.when(phase == 1)
    def _bn_fg_phase():
        inv_nhw = 1.0 / float(N * H * W)
        mean = s1_scr[...] * inv_nhw                              # (1, 1)
        var = s2_scr[...] * inv_nhw - mean * mean                 # biased (PyTorch BN)
        bnv = bn_ref[...]                                         # (1, 2)
        gamma = bnv[:, 0:1]
        beta = bnv[:, 1:2]
        scale = jax.lax.rsqrt(var + eps) * gamma                  # (1, 1)

        acc = acc_scr[pl.ds(n, 1), :]                             # (1, HW)
        bn = (acc - mean) * scale + beta
        # PyTorch: inference=True skips the sigmoid (BN stays training-mode).
        ccam = bn if inference else jax.nn.sigmoid(bn)            # (1, HW)
        ccam_ref[0] = ccam                                        # lane-dense store

        # fg_sum and x_sum from one MXU contraction over HW (ones row folded in).
        x_n = x_ref[0]                                            # (C, HW)
        lhs = jnp.concatenate([ccam, jnp.ones_like(ccam)], axis=0)  # (2, HW)
        sums = jax.lax.dot_general(
            lhs, x_n,
            dimension_numbers=(((1,), (1,)), ((), ())),
            preferred_element_type=jnp.float32)                   # (2, C)
        inv_hw = 1.0 / float(HW)
        fg_sum = sums[0:1, :]
        x_sum = sums[1:2, :]
        fgbg_ref[0] = jnp.concatenate(
            [fg_sum * inv_hw, (x_sum - fg_sum) * inv_hw], axis=-1)  # (1, 2C)


def disentangler_forward(x, weight, gamma, beta, *, eps=1e-5, inference=False):
    """x: (N, C, H, W) f32; weight: (1, C, 3, 3) f32; gamma/beta: scalars."""
    N, C, H, W = x.shape
    HW = H * W
    x_flat = x.reshape(N, C, HW).astype(jnp.float32)                       # (N, C, HW)
    w9 = jnp.transpose(weight.reshape(C, 9), (1, 0)).astype(jnp.float32)   # (9, C)
    bn_params = jnp.array([[gamma, beta]], dtype=jnp.float32)              # (1, 2)

    # Precomputed edge masks (output-pixel validity) for the 8 non-center taps,
    # hoisted out of the kernel loop entirely.  Order matches the kernel's unroll.
    rows = np.arange(HW) // W
    cols = np.arange(HW) % W
    tap_masks = []
    for ky in range(3):
        for kx in range(3):
            dy, dx = ky - 1, kx - 1
            if dy == 0 and dx == 0:
                continue
            m = np.ones(HW, np.float32)
            if dy == -1:
                m *= (rows >= 1)
            elif dy == 1:
                m *= (rows <= H - 2)
            if dx == -1:
                m *= (cols >= 1)
            elif dx == 1:
                m *= (cols <= W - 2)
            tap_masks.append(m)
    masks = jnp.asarray(np.stack(tap_masks, axis=0))                       # (8, HW)

    kernel = functools.partial(disentangler_kernel, N=N, C=C, H=H, W=W,
                               eps=float(eps), inference=bool(inference))

    flops = 2 * N * HW * C * (9 + 2) + 32 * N * HW
    bytes_accessed = (2 * N * C * HW * 4        # x read in both phases
                      + N * HW * 4 + N * 2 * C * 4
                      + 9 * C * 4 + 8 * HW * 4 + 8)

    fgbg, ccam3 = pl.pallas_call(
        kernel,
        out_shape=(
            jax.ShapeDtypeStruct((N, 1, 2 * C), jnp.float32),
            jax.ShapeDtypeStruct((N, 1, HW), jnp.float32),
        ),
        grid=(2, N),                                   # (phase, sample)
        in_specs=[
            pl.BlockSpec((9, C), lambda ph, n: (0, 0)),          # w9, resident
            pl.BlockSpec((8, HW), lambda ph, n: (0, 0)),         # tap masks, resident
            pl.BlockSpec((1, 2), lambda ph, n: (0, 0)),          # gamma/beta
            pl.BlockSpec((1, C, HW), lambda ph, n: (n, 0, 0)),   # x[n], pipelined
        ],
        out_specs=(
            # Block index pinned to 0 during phase 0 so no stale writebacks occur;
            # real data is written (and flushed) only during phase 1.
            pl.BlockSpec((1, 1, 2 * C), lambda ph, n: (n * ph, 0, 0)),
            pl.BlockSpec((1, 1, HW), lambda ph, n: (n * ph, 0, 0)),
        ),
        scratch_shapes=[
            pltpu.VMEM((N, HW), jnp.float32),   # conv pre-activation, persistent
            pltpu.VMEM((1, 1), jnp.float32),    # BN sum
            pltpu.VMEM((1, 1), jnp.float32),    # BN sum of squares
        ],
        compiler_params=pltpu.CompilerParams(
            # Both "arbitrary": phase 1 depends on BN stats accumulated over ALL n
            # in phase 0 via shared scratch, so N must not be split across cores.
            dimension_semantics=("arbitrary", "arbitrary"),
            vmem_limit_bytes=32 * 1024 * 1024,
        ),
        cost_estimate=pl.CostEstimate(
            flops=int(flops),
            transcendentals=int(N * HW),
            bytes_accessed=int(bytes_accessed),
        ),
    )(w9, masks, bn_params, x_flat)

    fg = fgbg[:, 0, :C]
    bg = fgbg[:, 0, C:]
    ccam = ccam3.reshape(N, 1, H, W)
    return fg, bg, ccam


def _reference(x, weight, gamma, beta, eps=1e-5):
    """Plain-JAX reference mirroring the PyTorch forward (training-mode BN)."""
    N, C, H, W = x.shape
    conv = jax.lax.conv_general_dilated(
        x, weight, window_strides=(1, 1), padding="SAME",
        dimension_numbers=("NCHW", "OIHW", "NCHW"))        # (N, 1, H, W)
    mean = jnp.mean(conv)
    var = jnp.mean((conv - mean) ** 2)
    bn = (conv - mean) / jnp.sqrt(var + eps) * gamma + beta
    ccam = jax.nn.sigmoid(bn)
    ccam_ = ccam.reshape(N, 1, H * W)
    xr = jnp.transpose(x.reshape(N, C, H * W), (0, 2, 1))  # (N, HW, C)
    fg = jnp.matmul(ccam_, xr) / (H * W)
    bg = jnp.matmul(1.0 - ccam_, xr) / (H * W)
    return fg.reshape(N, -1), bg.reshape(N, -1), ccam


if __name__ == "__main__":
    key = jax.random.PRNGKey(0)
    kx_, kw_ = jax.random.split(key)
    N, C, H, W = 2, 4, 16, 16

    x = jax.random.normal(kx_, (N, C, H, W), dtype=jnp.float32)
    # Deterministic synthetic init for Conv2d(cin, 1, 3, padding=1, bias=False)
    weight = jax.random.normal(kw_, (1, C, 3, 3), dtype=jnp.float32) * 0.1
    gamma, beta = 1.0, 0.0                                  # BatchNorm2d init

    fg, bg, ccam = disentangler_forward(x, weight, gamma, beta)
    jax.block_until_ready((fg, bg, ccam))

    fg_r, bg_r, ccam_r = _reference(x, weight, gamma, beta)
    assert np.allclose(np.asarray(fg), np.asarray(fg_r), atol=1e-3, rtol=1e-3)
    assert np.allclose(np.asarray(bg), np.asarray(bg_r), atol=1e-3, rtol=1e-3)
    assert np.allclose(np.asarray(ccam), np.asarray(ccam_r), atol=1e-3, rtol=1e-3)

    print("KERNEL_OK")
</pallas_src>

<mosaic_0001>
module attributes {stable_mosaic.version = 11 : i64} {
  func.func @disentangler_kernel(%arg0: i32, %arg1: i32, %arg2: memref<9x4xf32, #tpu.memory_space<vmem>>, %arg3: memref<8x256xf32, #tpu.memory_space<vmem>>, %arg4: memref<1x2xf32, #tpu.memory_space<vmem>>, %arg5: memref<1x4x256xf32, #tpu.memory_space<vmem>>, %arg6: memref<1x1x8xf32, #tpu.memory_space<vmem>>, %arg7: memref<1x1x256xf32, #tpu.memory_space<vmem>>, %arg8: memref<2x256xf32, #tpu.memory_space<vmem>>, %arg9: memref<1x1xf32, #tpu.memory_space<vmem>>, %arg10: memref<1x1xf32, #tpu.memory_space<vmem>>) attributes {dimension_semantics = [#tpu.dimension_semantics<arbitrary>, #tpu.dimension_semantics<arbitrary>], iteration_bounds = array<i64: 2, 2>, scalar_prefetch = 0 : i64, scratch_operands = 3 : i64, tpu.core_type = #tpu.core_type<tc>, window_params = [{pipeline_mode = #tpu.pipeline_mode<synchronous>, transform_indices = @transform_0, window_bounds = array<i64: 9, 4>}, {pipeline_mode = #tpu.pipeline_mode<synchronous>, transform_indices = @transform_1, window_bounds = array<i64: 8, 256>}, {pipeline_mode = #tpu.pipeline_mode<synchronous>, transform_indices = @transform_2, window_bounds = array<i64: 1, 2>}, {transform_indices = @transform_3, window_bounds = array<i64: 1, 4, 256>}, {transform_indices = @transform_4, window_bounds = array<i64: 1, 1, 8>}, {transform_indices = @transform_5, window_bounds = array<i64: 1, 1, 256>}]} {
    %c0_i32 = arith.constant 0 : i32
    %0 = arith.cmpi eq, %arg0, %c0_i32 : i32
    %c0_i32_0 = arith.constant 0 : i32
    %1 = arith.cmpi eq, %arg1, %c0_i32_0 : i32
    %2 = arith.andi %0, %1 : i1
    %3 = arith.extui %2 : i1 to i32
    %c0_i32_1 = arith.constant 0 : i32
    %4 = arith.cmpi ne, %3, %c0_i32_1 : i32
    scf.if %4 {
      %cst = arith.constant 0.000000e+00 : f32
      %11 = vector.broadcast %cst : f32 to vector<1x1xf32>
      %c0 = arith.constant 0 : index
      %c0_5 = arith.constant 0 : index
      %12 = vector.load %arg9[%c0, %c0_5] : memref<1x1xf32, #tpu.memory_space<vmem>>, vector<1x1xf32>
      tpu.vector_store %arg9[%c0, %c0_5], %11 {strides = array<i32>} : memref<1x1xf32, #tpu.memory_space<vmem>>, vector<1x1xf32>,
      %cst_6 = arith.constant 0.000000e+00 : f32
      %13 = vector.broadcast %cst_6 : f32 to vector<1x1xf32>
      %c0_7 = arith.constant 0 : index
      %c0_8 = arith.constant 0 : index
      %14 = vector.load %arg10[%c0_7, %c0_8] : memref<1x1xf32, #tpu.memory_space<vmem>>, vector<1x1xf32>
      tpu.vector_store %arg10[%c0_7, %c0_8], %13 {strides = array<i32>} : memref<1x1xf32, #tpu.memory_space<vmem>>, vector<1x1xf32>,
    } else {
    }
    %c0_i32_2 = arith.constant 0 : i32
    %5 = arith.cmpi eq, %arg0, %c0_i32_2 : i32
    %6 = arith.extui %5 : i1 to i32
    %c0_i32_3 = arith.constant 0 : i32
    %7 = arith.cmpi ne, %6, %c0_i32_3 : i32
    scf.if %7 {
      %c0 = arith.constant 0 : index
      %c0_5 = arith.constant 0 : index
      %c0_6 = arith.constant 0 : index
      %11 = vector.load %arg5[%c0, %c0_5, %c0_6] : memref<1x4x256xf32, #tpu.memory_space<vmem>>, vector<1x4x256xf32>
      %12 = vector.shape_cast %11 : vector<1x4x256xf32> to vector<4x256xf32>
      %c0_7 = arith.constant 0 : index
      %c0_8 = arith.constant 0 : index
      %13 = vector.load %arg2[%c0_7, %c0_8] : memref<9x4xf32, #tpu.memory_space<vmem>>, vector<9x4xf32>
      %cst = arith.constant dense<0.000000e+00> : vector<9x256xf32>
      %14 = tpu.matmul %13, %12, %cst {dimension_numbers = #tpu.dot_dimension_numbers<[1], [0], [0], [1], [0, 0, 1, 1], [], []>} : vector<9x4xf32>, vector<4x256xf32>, vector<9x256xf32> -> vector<9x256xf32>
      %c0_9 = arith.constant 0 : index
      %c0_10 = arith.constant 0 : index
      %15 = vector.load %arg3[%c0_9, %c0_10] : memref<8x256xf32, #tpu.memory_space<vmem>>, vector<8x256xf32>
      %16 = vector.extract_strided_slice %14 {offsets = [4, 0], sizes = [1, 256], strides = [1, 1]} : vector<9x256xf32> to vector<1x256xf32>
      %17 = vector.extract_strided_slice %14 {offsets = [0, 0], sizes = [1, 256], strides = [1, 1]} : vector<9x256xf32> to vector<1x256xf32>
      %c17_i32 = arith.constant 17 : i32
      %18 = tpu.dynamic_rotate %17 by %c17_i32 dim 1 : vector<1x256xf32>, i32 -> vector<1x256xf32>
      %19 = vector.extract_strided_slice %15 {offsets = [0, 0], sizes = [1, 256], strides = [1, 1]} : vector<8x256xf32> to vector<1x256xf32>
      %20 = arith.mulf %18, %19 : vector<1x256xf32>
      %21 = arith.addf %16, %20 : vector<1x256xf32>
      %22 = vector.extract_strided_slice %14 {offsets = [1, 0], sizes = [1, 256], strides = [1, 1]} : vector<9x256xf32> to vector<1x256xf32>
      %c16_i32 = arith.constant 16 : i32
      %23 = tpu.dynamic_rotate %22 by %c16_i32 dim 1 : vector<1x256xf32>, i32 -> vector<1x256xf32>
      %24 = vector.extract_strided_slice %15 {offsets = [1, 0], sizes = [1, 256], strides = [1, 1]} : vector<8x256xf32> to vector<1x256xf32>
      %25 = arith.mulf %23, %24 : vector<1x256xf32>
      %26 = arith.addf %21, %25 : vector<1x256xf32>
      %27 = vector.extract_strided_slice %14 {offsets = [2, 0], sizes = [1, 256], strides = [1, 1]} : vector<9x256xf32> to vector<1x256xf32>
      %c15_i32 = arith.constant 15 : i32
      %28 = tpu.dynamic_rotate %27 by %c15_i32 dim 1 : vector<1x256xf32>, i32 -> vector<1x256xf32>
      %29 = vector.extract_strided_slice %15 {offsets = [2, 0], sizes = [1, 256], strides = [1, 1]} : vector<8x256xf32> to vector<1x256xf32>
      %30 = arith.mulf %28, %29 : vector<1x256xf32>
      %31 = arith.addf %26, %30 : vector<1x256xf32>
      %32 = vector.extract_strided_slice %14 {offsets = [3, 0], sizes = [1, 256], strides = [1, 1]} : vector<9x256xf32> to vector<1x256xf32>
      %c1_i32_11 = arith.constant 1 : i32
      %33 = tpu.dynamic_rotate %32 by %c1_i32_11 dim 1 : vector<1x256xf32>, i32 -> vector<1x256xf32>
      %34 = vector.extract_strided_slice %15 {offsets = [3, 0], sizes = [1, 256], strides = [1, 1]} : vector<8x256xf32> to vector<1x256xf32>
      %35 = arith.mulf %33, %34 : vector<1x256xf32>
      %36 = arith.addf %31, %35 : vector<1x256xf32>
      %37 = vector.extract_strided_slice %14 {offsets = [5, 0], sizes = [1, 256], strides = [1, 1]} : vector<9x256xf32> to vector<1x256xf32>
      %c255_i32 = arith.constant 255 : i32
      %38 = tpu.dynamic_rotate %37 by %c255_i32 dim 1 : vector<1x256xf32>, i32 -> vector<1x256xf32>
      %39 = vector.extract_strided_slice %15 {offsets = [4, 0], sizes = [1, 256], strides = [1, 1]} : vector<8x256xf32> to vector<1x256xf32>
      %40 = arith.mulf %38, %39 : vector<1x256xf32>
      %41 = arith.addf %36, %40 : vector<1x256xf32>
      %42 = vector.extract_strided_slice %14 {offsets = [6, 0], sizes = [1, 256], strides = [1, 1]} : vector<9x256xf32> to vector<1x256xf32>
      %c241_i32 = arith.constant 241 : i32
      %43 = tpu.dynamic_rotate %42 by %c241_i32 dim 1 : vector<1x256xf32>, i32 -> vector<1x256xf32>
      %44 = vector.extract_strided_slice %15 {offsets = [5, 0], sizes = [1, 256], strides = [1, 1]} : vector<8x256xf32> to vector<1x256xf32>
      %45 = arith.mulf %43, %44 : vector<1x256xf32>
      %46 = arith.addf %41, %45 : vector<1x256xf32>
      %47 = vector.extract_strided_slice %14 {offsets = [7, 0], sizes = [1, 256], strides = [1, 1]} : vector<9x256xf32> to vector<1x256xf32>
      %c240_i32 = arith.constant 240 : i32
      %48 = tpu.dynamic_rotate %47 by %c240_i32 dim 1 : vector<1x256xf32>, i32 -> vector<1x256xf32>
      %49 = vector.extract_strided_slice %15 {offsets = [6, 0], sizes = [1, 256], strides = [1, 1]} : vector<8x256xf32> to vector<1x256xf32>
      %50 = arith.mulf %48, %49 : vector<1x256xf32>
      %51 = arith.addf %46, %50 : vector<1x256xf32>
      %52 = vector.extract_strided_slice %14 {offsets = [8, 0], sizes = [1, 256], strides = [1, 1]} : vector<9x256xf32> to vector<1x256xf32>
      %c239_i32 = arith.constant 239 : i32
      %53 = tpu.dynamic_rotate %52 by %c239_i32 dim 1 : vector<1x256xf32>, i32 -> vector<1x256xf32>
      %54 = vector.extract_strided_slice %15 {offsets = [7, 0], sizes = [1, 256], strides = [1, 1]} : vector<8x256xf32> to vector<1x256xf32>
      %55 = arith.mulf %53, %54 : vector<1x256xf32>
      %56 = arith.addf %51, %55 : vector<1x256xf32>
      %57 = arith.index_cast %arg1 : i32 to index
      %c0_12 = arith.constant 0 : index
      %58 = vector.load %arg8[%57, %c0_12] : memref<2x256xf32, #tpu.memory_space<vmem>>, vector<1x256xf32>
      tpu.vector_store %arg8[%57, %c0_12], %56 {strides = array<i32>} : memref<2x256xf32, #tpu.memory_space<vmem>>, vector<1x256xf32>,
      %c0_13 = arith.constant 0 : index
      %c0_14 = arith.constant 0 : index
      %59 = vector.load %arg9[%c0_13, %c0_14] : memref<1x1xf32, #tpu.memory_space<vmem>>, vector<1x1xf32>
      %60 = vector.shape_cast %56 : vector<1x256xf32> to vector<1x1x256xf32>
      %cst_15 = arith.constant dense<0.000000e+00> : vector<1xf32>
      %61 = vector.multi_reduction <add>, %60, %cst_15 [1, 2] : vector<1x1x256xf32> to vector<1xf32>
      %62 = vector.shape_cast %61 : vector<1xf32> to vector<1x1x1xf32>
      %63 = vector.extract %62[0, 0, 0] : f32 from vector<1x1x1xf32>
      %64 = vector.broadcast %63 : f32 to vector<1x1xf32>
      %65 = arith.addf %59, %64 : vector<1x1xf32>
      %c0_16 = arith.constant 0 : index
      %c0_17 = arith.constant 0 : index
      %66 = vector.load %arg9[%c0_16, %c0_17] : memref<1x1xf32, #tpu.memory_space<vmem>>, vector<1x1xf32>
      tpu.vector_store %arg9[%c0_16, %c0_17], %65 {strides = array<i32>} : memref<1x1xf32, #tpu.memory_space<vmem>>, vector<1x1xf32>,
      %c0_18 = arith.constant 0 : index
      %c0_19 = arith.constant 0 : index
      %67 = vector.load %arg10[%c0_18, %c0_19] : memref<1x1xf32, #tpu.memory_space<vmem>>, vector<1x1xf32>
      %68 = arith.mulf %56, %56 : vector<1x256xf32>
      %69 = vector.shape_cast %68 : vector<1x256xf32> to vector<1x1x256xf32>
      %cst_20 = arith.constant dense<0.000000e+00> : vector<1xf32>
      %70 = vector.multi_reduction <add>, %69, %cst_20 [1, 2] : vector<1x1x256xf32> to vector<1xf32>
      %71 = vector.shape_cast %70 : vector<1xf32> to vector<1x1x1xf32>
      %72 = vector.extract %71[0, 0, 0] : f32 from vector<1x1x1xf32>
      %73 = vector.broadcast %72 : f32 to vector<1x1xf32>
      %74 = arith.addf %67, %73 : vector<1x1xf32>
      %c0_21 = arith.constant 0 : index
      %c0_22 = arith.constant 0 : index
      %75 = vector.load %arg10[%c0_21, %c0_22] : memref<1x1xf32, #tpu.memory_space<vmem>>, vector<1x1xf32>
      tpu.vector_store %arg10[%c0_21, %c0_22], %74 {strides = array<i32>} : memref<1x1xf32, #tpu.memory_space<vmem>>, vector<1x1xf32>,
    } else {
    }
    %c1_i32 = arith.constant 1 : i32
    %8 = arith.cmpi eq, %arg0, %c1_i32 : i32
    %9 = arith.extui %8 : i1 to i32
    %c0_i32_4 = arith.constant 0 : i32
    %10 = arith.cmpi ne, %9, %c0_i32_4 : i32
    scf.if %10 {
      %c0 = arith.constant 0 : index
      %c0_5 = arith.constant 0 : index
      %11 = vector.load %arg9[%c0, %c0_5] : memref<1x1xf32, #tpu.memory_space<vmem>>, vector<1x1xf32>
      %cst = arith.constant 0.001953125 : f32
      %12 = vector.broadcast %cst : f32 to vector<1x1xf32>
      %13 = arith.mulf %11, %12 : vector<1x1xf32>
      %c0_6 = arith.constant 0 : index
      %c0_7 = arith.constant 0 : index
      %14 = vector.load %arg10[%c0_6, %c0_7] : memref<1x1xf32, #tpu.memory_space<vmem>>, vector<1x1xf32>
      %cst_8 = arith.constant 0.001953125 : f32
      %15 = vector.broadcast %cst_8 : f32 to vector<1x1xf32>
      %16 = arith.mulf %14, %15 : vector<1x1xf32>
      %17 = arith.mulf %13, %13 : vector<1x1xf32>
      %18 = arith.subf %16, %17 : vector<1x1xf32>
      %c0_9 = arith.constant 0 : index
      %c0_10 = arith.constant 0 : index
      %19 = vector.load %arg4[%c0_9, %c0_10] : memref<1x2xf32, #tpu.memory_space<vmem>>, vector<1x2xf32>
      %20 = vector.extract_strided_slice %19 {offsets = [0, 0], sizes = [1, 1], strides = [1, 1]} : vector<1x2xf32> to vector<1x1xf32>
      %21 = vector.extract_strided_slice %19 {offsets = [0, 1], sizes = [1, 1], strides = [1, 1]} : vector<1x2xf32> to vector<1x1xf32>
      %cst_11 = arith.constant 9.99999974E-6 : f32
      %22 = vector.broadcast %cst_11 : f32 to vector<1x1xf32>
      %23 = arith.addf %18, %22 : vector<1x1xf32>
      %24 = math.rsqrt %23 : vector<1x1xf32>
      %25 = arith.mulf %24, %20 : vector<1x1xf32>
      %26 = arith.index_cast %arg1 : i32 to index
      %c0_12 = arith.constant 0 : index
      %27 = vector.load %arg8[%26, %c0_12] : memref<2x256xf32, #tpu.memory_space<vmem>>, vector<1x256xf32>
      %28 = vector.broadcast %13 : vector<1x1xf32> to vector<1x256xf32>
      %29 = arith.subf %27, %28 : vector<1x256xf32>
      %30 = vector.broadcast %25 : vector<1x1xf32> to vector<1x256xf32>
      %31 = arith.mulf %29, %30 : vector<1x256xf32>
      %32 = vector.broadcast %21 : vector<1x1xf32> to vector<1x256xf32>
      %33 = arith.addf %31, %32 : vector<1x256xf32>
      %34 = arith.negf %33 : vector<1x256xf32>
      %35 = math.exp %34 : vector<1x256xf32>
      %cst_13 = arith.constant 1.000000e+00 : f32
      %36 = vector.broadcast %cst_13 : f32 to vector<1x256xf32>
      %37 = arith.addf %36, %35 : vector<1x256xf32>
      %38 = arith.divf %36, %37 : vector<1x256xf32>
      %c0_14 = arith.constant 0 : index
      %c0_15 = arith.constant 0 : index
      %c0_16 = arith.constant 0 : index
      %39 = vector.load %arg7[%c0_14, %c0_15, %c0_16] : memref<1x1x256xf32, #tpu.memory_space<vmem>>, vector<1x1x256xf32>
      %40 = vector.shape_cast %39 : vector<1x1x256xf32> to vector<1x256xf32>
      %41 = vector.shape_cast %38 : vector<1x256xf32> to vector<1x1x256xf32>
      tpu.vector_store %arg7[%c0_14, %c0_15, %c0_16], %41 {strides = array<i32>} : memref<1x1x256xf32, #tpu.memory_space<vmem>>, vector<1x1x256xf32>,
      %c0_17 = arith.constant 0 : index
      %c0_18 = arith.constant 0 : index
      %c0_19 = arith.constant 0 : index
      %42 = vector.load %arg5[%c0_17, %c0_18, %c0_19] : memref<1x4x256xf32, #tpu.memory_space<vmem>>, vector<1x4x256xf32>
      %43 = vector.shape_cast %42 : vector<1x4x256xf32> to vector<4x256xf32>
      %cst_20 = arith.constant 1.000000e+00 : f32
      %44 = vector.broadcast %cst_20 : f32 to vector<1x256xf32>
      %45 = tpu.concatenate %38, %44 in 0 : vector<1x256xf32>, vector<1x256xf32> -> vector<2x256xf32>
      %cst_21 = arith.constant dense<0.000000e+00> : vector<2x4xf32>
      %46 = tpu.matmul %45, %43, %cst_21 {dimension_numbers = #tpu.dot_dimension_numbers<[1], [1], [0], [0], [0, 0, 1, 0], [], []>} : vector<2x256xf32>, vector<4x256xf32>, vector<2x4xf32> -> vector<2x4xf32>
      %47 = vector.extract_strided_slice %46 {offsets = [0, 0], sizes = [1, 4], strides = [1, 1]} : vector<2x4xf32> to vector<1x4xf32>
      %48 = vector.extract_strided_slice %46 {offsets = [1, 0], sizes = [1, 4], strides = [1, 1]} : vector<2x4xf32> to vector<1x4xf32>
      %cst_22 = arith.constant 3.906250e-03 : f32
      %49 = vector.broadcast %cst_22 : f32 to vector<1x4xf32>
      %50 = arith.mulf %47, %49 : vector<1x4xf32>
      %51 = arith.subf %48, %47 : vector<1x4xf32>
      %cst_23 = arith.constant 3.906250e-03 : f32
      %52 = vector.broadcast %cst_23 : f32 to vector<1x4xf32>
      %53 = arith.mulf %51, %52 : vector<1x4xf32>
      %54 = tpu.concatenate %50, %53 in 1 : vector<1x4xf32>, vector<1x4xf32> -> vector<1x8xf32>
      %c0_24 = arith.constant 0 : index
      %c0_25 = arith.constant 0 : index
      %c0_26 = arith.constant 0 : index
      %55 = vector.load %arg6[%c0_24, %c0_25, %c0_26] : memref<1x1x8xf32, #tpu.memory_space<vmem>>, vector<1x1x8xf32>
      %56 = vector.shape_cast %55 : vector<1x1x8xf32> to vector<1x8xf32>
      %57 = vector.shape_cast %54 : vector<1x8xf32> to vector<1x1x8xf32>
      tpu.vector_store %arg6[%c0_24, %c0_25, %c0_26], %57 {strides = array<i32>} : memref<1x1x8xf32, #tpu.memory_space<vmem>>, vector<1x1x8xf32>,
    } else {
    }
    return
  }
  func.func @transform_0(%arg0: i32, %arg1: i32) -> (i32, i32) {
    %c0_i32 = arith.constant 0 : i32
    %c0_i32_0 = arith.constant 0 : i32
    %c0_i32_1 = arith.constant 0 : i32
    return %c0_i32, %c0_i32_0 : i32, i32
  }
  func.func @transform_1(%arg0: i32, %arg1: i32) -> (i32, i32) {
    %c0_i32 = arith.constant 0 : i32
    %c0_i32_0 = arith.constant 0 : i32
    %c0_i32_1 = arith.constant 0 : i32
    return %c0_i32, %c0_i32_0 : i32, i32
  }
  func.func @transform_2(%arg0: i32, %arg1: i32) -> (i32, i32) {
    %c0_i32 = arith.constant 0 : i32
    %c0_i32_0 = arith.constant 0 : i32
    %c0_i32_1 = arith.constant 0 : i32
    return %c0_i32, %c0_i32_0 : i32, i32
  }
  func.func @transform_3(%arg0: i32, %arg1: i32) -> (i32, i32, i32) {
    %c0_i32 = arith.constant 0 : i32
    %c0_i32_0 = arith.constant 0 : i32
    %c0_i32_1 = arith.constant 0 : i32
    return %arg1, %c0_i32, %c0_i32_0 : i32, i32, i32
  }
  func.func @transform_4(%arg0: i32, %arg1: i32) -> (i32, i32, i32) {
    %0 = arith.muli %arg1, %arg0 : i32
    %c0_i32 = arith.constant 0 : i32
    %c0_i32_0 = arith.constant 0 : i32
    %c0_i32_1 = arith.constant 0 : i32
    return %0, %c0_i32, %c0_i32_0 : i32, i32, i32
  }
  func.func @transform_5(%arg0: i32, %arg1: i32) -> (i32, i32, i32) {
    %0 = arith.muli %arg1, %arg0 : i32
    %c0_i32 = arith.constant 0 : i32
    %c0_i32_0 = arith.constant 0 : i32
    %c0_i32_1 = arith.constant 0 : i32
    return %0, %c0_i32, %c0_i32_0 : i32, i32, i32
  }
}

</mosaic_0001>

<llo_original>
// kernel: tpu_custom_call.1
$region0: #{tpu_custom_call.1}
  #allocation0 [shape = 'u32[]', space=smem, size = 0x4, offset = 0x4, fixed_abs, tag = 'smem constant byte address 0x4 - core index']
  #allocation1 [shape = 'u32[144,128]{1,0:T(1,128)}', space=vmem, size = 0x12000, scoped, tag = 'internal scratch']
  #allocation2 [shape = 'f32[2,256]{1,0:T(2,128)}', space=vmem, size = 0x800, scoped, tag = 'scratch operand']
  #allocation3 [shape = 'f32[1,1]{1,0:T(1,128)}', space=vmem, size = 0x200, scoped, tag = 'scratch operand']
  #allocation4 [shape = 'f32[1,1]{1,0:T(1,128)}', space=vmem, size = 0x200, scoped, tag = 'scratch operand']
  %s0 = inlined_call_operand.vmem [shape: f32[9,4], index: 0, kind: input, shape index: {}]
  %s1 = inlined_call_operand.vmem [shape: f32[8,256], index: 1, kind: input, shape index: {}]
  %s2 = inlined_call_operand.vmem [shape: f32[1,2], index: 2, kind: input, shape index: {}]
  %s3 = inlined_call_operand.hbm [shape: f32[2,4,256], index: 3, kind: input, shape index: {}]
  %s4 = inlined_call_operand.hbm [shape: f32[2,1,8], index: 4, kind: output, shape index: {0}]
  %s5 = inlined_call_operand.hbm [shape: f32[2,1,256], index: 5, kind: output, shape index: {1}]
  %6 = xla_tuple %s4, %s5
  %s7 = sld [smem:[#allocation0]]
  $region73: #{tpu_custom_call.1} parent=0
    _
  %s9 = ssub.s32 1, %s7
  %s10 = scalar_select 0, %s9, %s7
  $region1: #{tpu_custom_call.1} parent=0
    #allocation5 [shape = 'u8[8192]{0}', space=vmem, size = 0x2000, scoped, tag = 'input window, operand 3']
    #allocation6 [shape = 's32[2]{0}', space=sflag, size = 0x8, scoped, tag = 'scoped memory for tpu_custom_call.1']
    #allocation7 [shape = 's32[2]{0}', space=sflag, size = 0x8, scoped, tag = 'scoped memory for tpu_custom_call.1']
    #allocation8 [shape = 'u8[1024]{0}', space=vmem, size = 0x400, scoped, tag = 'output window, operand 0']
    #allocation9 [shape = 'u8[2048]{0}', space=vmem, size = 0x800, scoped, tag = 'output window, operand 1']
    #allocation10 [shape = 's32[2]{0}', space=sflag, size = 0x8, scoped, tag = 'scoped memory for tpu_custom_call.1']
    %11 = vsyncpa [#allocation6], 0
    %s12 = scalar_lea.sflag [#allocation6], 1
    %13 = vsyncpa %s12, 0
    %14 = vsyncpa [#allocation7], 0
    %s15 = scalar_lea.sflag [#allocation7], 1
    %16 = vsyncpa %s15, 0
    %17 = vsyncpa [#allocation10], 0
    %s18 = scalar_lea.sflag [#allocation10], 1
    %19 = vsyncpa %s18, 0
    loop: start=0, step=1, limit=6
    $region2: #{tpu_custom_call.1} parent=1 // loop_pre_header
      _
    $region3: #{tpu_custom_call.1} parent=1 // loop_header
      %s21 = sphi 0, %s25
      %p22 = scmp.ge.s32.totalorder %s21, 6
      %s28 = sphi 0, %s40
      %s29 = sphi 0, %s36
      %s30 = sphi 0, %s28
      %s31 = sphi 0, %s29
      %s32 = sphi 0, %s30
      %s33 = sphi 0, %s31
      %s41 = sphi 0, %s41
      %s43 = sphi 0, %s41
      %s44 = sphi 0, %s43
      %s58 = sphi 0, %s44
      %s62 = sphi 0, %s62
      %s64 = sphi 0, %s62
      %s65 = sphi 0, %s64
      %s79 = sphi 0, %s65
      %s83 = sphi 0, %s83
      %s85 = sphi 0, %s83
      %s86 = sphi 0, %s85
      %s100 = sphi 0, %s86
      %s106 = sphi 0, %s108
      %s109 = sphi 0, %s106
      %s110 = sphi 0, %s109
      %s126 = sphi 0, %s110
      %s134 = sphi 0, %s136
      %s137 = sphi 0, %s134
      %s138 = sphi 0, %s137
      %s154 = sphi 0, %s138
      %s162 = sphi 0, %s164
      %s165 = sphi 0, %s162
      %s166 = sphi 0, %s165
      %s182 = sphi 0, %s166
    $region4: #{tpu_custom_call.1} parent=1 // loop_header_branch
      %24 = sbr.rel (%p22) target = $region8
    $region5: #{tpu_custom_call.1} parent=1 // loop_body
      %s26 = ssub.s32 %s21, 1
      %s27 = ssub.s32 %s21, 2
      %s34 = sadd.s32 1, %s29
      %p35 = scmp.ge.s32.totalorder %s34, 2
      %s36 = scalar_select %p35, 0, %s34
      %s37 = sadd.s32 1, %s28
      %s38 = scalar_select %p35, %s37, %s28
      %p39 = scmp.ge.s32.totalorder %s38, 2
      %s40 = scalar_select %p39, 0, %s38
      %s42 = sadd.s32 %s41, 1
      %p45 = scmp.eq.s32.totalorder %s21, 3
      %p46 = scmp.ne.s32.totalorder %s41, %s43
      %p47 = scmp.eq.s32.totalorder %s21, 0
      %p48 = por %p46, %p47
      %p49 = scmp.ne.s32.totalorder %s41, %s43
      %p50 = scmp.eq.s32.totalorder %s26, 3
      %p51 = por %p49, %p50
      %p52 = scmp.ne.s32.totalorder %s43, %s44
      %p53 = scmp.eq.s32.totalorder %s26, 0
      %p54 = por %p52, %p53
      %p55 = scmp.ne.s32.totalorder %s43, %s44
      %p56 = scmp.eq.s32.totalorder %s27, 3
      %p57 = por %p55, %p56
      %p59 = scmp.ne.s32.totalorder %s44, %s58
      %p60 = scmp.eq.s32.totalorder %s27, 0
      %p61 = por %p59, %p60
      %s63 = sadd.s32 %s62, 1
      %p66 = scmp.eq.s32.totalorder %s21, 3
      %p67 = scmp.ne.s32.totalorder %s62, %s64
      %p68 = scmp.eq.s32.totalorder %s21, 0
      %p69 = por %p67, %p68
      %p70 = scmp.ne.s32.totalorder %s62, %s64
      %p71 = scmp.eq.s32.totalorder %s26, 3
      %p72 = por %p70, %p71
      %p73 = scmp.ne.s32.totalorder %s64, %s65
      %p74 = scmp.eq.s32.totalorder %s26, 0
      %p75 = por %p73, %p74
      %p76 = scmp.ne.s32.totalorder %s64, %s65
      %p77 = scmp.eq.s32.totalorder %s27, 3
      %p78 = por %p76, %p77
      %p80 = scmp.ne.s32.totalorder %s65, %s79
      %p81 = scmp.eq.s32.totalorder %s27, 0
      %p82 = por %p80, %p81
      %s84 = sadd.s32 %s83, 1
      %p87 = scmp.eq.s32.totalorder %s21, 3
      %p88 = scmp.ne.s32.totalorder %s83, %s85
      %p89 = scmp.eq.s32.totalorder %s21, 0
      %p90 = por %p88, %p89
      %p91 = scmp.ne.s32.totalorder %s83, %s85
      %p92 = scmp.eq.s32.totalorder %s26, 3
      %p93 = por %p91, %p92
      %p94 = scmp.ne.s32.totalorder %s85, %s86
      %p95 = scmp.eq.s32.totalorder %s26, 0
      %p96 = por %p94, %p95
      %p97 = scmp.ne.s32.totalorder %s85, %s86
      %p98 = scmp.eq.s32.totalorder %s27, 3
      %p99 = por %p97, %p98
      %p101 = scmp.ne.s32.totalorder %s86, %s100
      %p102 = scmp.eq.s32.totalorder %s27, 0
      %p103 = por %p101, %p102
      %s104 = ssub.s32 %s29, %s36
      %p105 = scmp.eq.s32.totalorder %s104, 0
      %s107 = sadd.s32 %s106, 1
      %s108 = scalar_select %p105, %s106, %s107
      %p111 = pneg %p105
      %p112 = scmp.eq.s32.totalorder %s21, 3
      %p113 = por %p111, %p112
      %p114 = scmp.ne.s32.totalorder %s106, %s109
      %p115 = scmp.eq.s32.totalorder %s21, 0
      %p116 = por %p114, %p115
      %p117 = scmp.ne.s32.totalorder %s106, %s109
      %p118 = scmp.eq.s32.totalorder %s26, 3
      %p119 = por %p117, %p118
      %p120 = scmp.ne.s32.totalorder %s109, %s110
      %p121 = scmp.eq.s32.totalorder %s26, 0
      %p122 = por %p120, %p121
      %p123 = scmp.ne.s32.totalorder %s109, %s110
      %p124 = scmp.eq.s32.totalorder %s27, 3
      %p125 = por %p123, %p124
      %p127 = scmp.ne.s32.totalorder %s110, %s126
      %p128 = scmp.eq.s32.totalorder %s27, 0
      %p129 = por %p127, %p128
      %s130 = smul.u32 %s29, %s28
      %s131 = smul.u32 %s36, %s40
      %s132 = ssub.s32 %s130, %s131
      %p133 = scmp.eq.s32.totalorder %s132, 0
      %s135 = sadd.s32 %s134, 1
      %s136 = scalar_select %p133, %s134, %s135
      %p139 = pneg %p133
      %p140 = scmp.eq.s32.totalorder %s21, 3
      %p141 = por %p139, %p140
      %p142 = scmp.ne.s32.totalorder %s134, %s137
      %p143 = scmp.eq.s32.totalorder %s21, 0
      %p144 = por %p142, %p143
      %p145 = scmp.ne.s32.totalorder %s134, %s137
      %p146 = scmp.eq.s32.totalorder %s26, 3
      %p147 = por %p145, %p146
      %p148 = scmp.ne.s32.totalorder %s137, %s138
      %p149 = scmp.eq.s32.totalorder %s26, 0
      %p150 = por %p148, %p149
      %p151 = scmp.ne.s32.totalorder %s137, %s138
      %p152 = scmp.eq.s32.totalorder %s27, 3
      %p153 = por %p151, %p152
      %p155 = scmp.ne.s32.totalorder %s138, %s154
      %p156 = scmp.eq.s32.totalorder %s27, 0
      %p157 = por %p155, %p156
      %s158 = smul.u32 %s29, %s28
      %s159 = smul.u32 %s36, %s40
      %s160 = ssub.s32 %s158, %s159
      %p161 = scmp.eq.s32.totalorder %s160, 0
      %s163 = sadd.s32 %s162, 1
      %s164 = scalar_select %p161, %s162, %s163
      %p167 = pneg %p161
      %p168 = scmp.eq.s32.totalorder %s21, 3
      %p169 = por %p167, %p168
      %p170 = scmp.ne.s32.totalorder %s162, %s165
      %p171 = scmp.eq.s32.totalorder %s21, 0
      %p172 = por %p170, %p171
      %p173 = scmp.ne.s32.totalorder %s162, %s165
      %p174 = scmp.eq.s32.totalorder %s26, 3
      %p175 = por %p173, %p174
      %p176 = scmp.ne.s32.totalorder %s165, %s166
      %p177 = scmp.eq.s32.totalorder %s26, 0
      %p178 = por %p176, %p177
      %p179 = scmp.ne.s32.totalorder %s165, %s166
      %p180 = scmp.eq.s32.totalorder %s27, 3
      %p181 = por %p179, %p180
      %p183 = scmp.ne.s32.totalorder %s166, %s182
      %p184 = scmp.eq.s32.totalorder %s27, 0
      %p185 = por %p183, %p184
      %p186 = scmp.le.s32.totalorder 1, %s21
      %p187 = scmp.lt.s32.totalorder %s21, 5
      %p188 = pnand %p186, %p187
      %p189 = pneg %p188
      // Predicated region
      $region9: #{tpu_custom_call.1} parent=5 // pred_check
        _
      $region10: #{tpu_custom_call.1} parent=5 // pred_check_branch
        %191 = sbr.rel (%p188) target = $region12
      $region11: #{tpu_custom_call.1} parent=5 // pred_region
        %s192 = ssub.s32 %s21, 1
        // Predicated region
        $region13: #{tpu_custom_call.1} parent=11 // pred_check
          %p193 = pneg %p54
        $region14: #{tpu_custom_call.1} parent=11 // pred_check_branch
          %195 = sbr.rel (%p193) target = $region16
        $region15: #{tpu_custom_call.1} parent=11 // pred_region
          _
        $region16: #{tpu_custom_call.1} parent=11 // pred_fallthru
          _
        // Predicated region
        $region17: #{tpu_custom_call.1} parent=11 // pred_check
          %p196 = pneg %p75
        $region18: #{tpu_custom_call.1} parent=11 // pred_check_branch
          %198 = sbr.rel (%p196) target = $region20
        $region19: #{tpu_custom_call.1} parent=11 // pred_region
          _
        $region20: #{tpu_custom_call.1} parent=11 // pred_fallthru
          _
        // Predicated region
        $region21: #{tpu_custom_call.1} parent=11 // pred_check
          %p199 = pneg %p96
        $region22: #{tpu_custom_call.1} parent=11 // pred_check_branch
          %201 = sbr.rel (%p199) target = $region24
        $region23: #{tpu_custom_call.1} parent=11 // pred_region
          _
        $region24: #{tpu_custom_call.1} parent=11 // pred_fallthru
          _
      $region12: #{tpu_custom_call.1} parent=5 // pred_fallthru
        _
      %p202 = scmp.lt.s32.totalorder %s21, 4
      // Predicated region
      $region25: #{tpu_custom_call.1} parent=5 // pred_check
        %p203 = pneg %p202
      $region26: #{tpu_custom_call.1} parent=5 // pred_check_branch
        %205 = sbr.rel (%p203) target = $region28
      $region27: #{tpu_custom_call.1} parent=5 // pred_region
        // Predicated region
        $region29: #{tpu_custom_call.1} parent=27 // pred_check
          %p206 = pneg %p116
        $region30: #{tpu_custom_call.1} parent=27 // pred_check_branch
          %208 = sbr.rel (%p206) target = $region32
        $region31: #{tpu_custom_call.1} parent=27 // pred_region
          %s209 = sand.u32 %s106, 1
          %s210 = scalar_lea.sflag [#allocation6], %s209
          %s211 = sand.u32 %s106, 1
          %s212 = smul.addr %s211, 8
          %s213 = scalar_lea.vmem [#allocation5], %s212
          %s215 = ssub.s32 128, 128
          %216 = vsyncadd %s210, %s215
          %s217 = smul.addr %s29, 2
          %s218 = smul.addr %s217, 64
          %s219 = scalar_lea.hbm %s3, %s218
          %s221 = sshll.u32 %s213, 4
          %s222 = int_to_ptr.vmem [resolvable:$true] %s221
          %224 = dma.hbm_to_vmem [thread:$0]  %s219, 128, %s222, %s210
        $region32: #{tpu_custom_call.1} parent=27 // pred_fallthru
          _
      $region28: #{tpu_custom_call.1} parent=5 // pred_fallthru
        _
      %p225 = scmp.le.s32.totalorder 1, %s21
      %p226 = scmp.lt.s32.totalorder %s21, 5
      %p227 = pnand %p225, %p226
      %p228 = pneg %p227
      // Predicated region
      $region33: #{tpu_custom_call.1} parent=5 // pred_check
        _
      $region34: #{tpu_custom_call.1} parent=5 // pred_check_branch
        %230 = sbr.rel (%p227) target = $region36
      $region35: #{tpu_custom_call.1} parent=5 // pred_region
        %s231 = ssub.s32 %s21, 1
        %s232 = sand.u32 %s109, 1
        %s233 = scalar_lea.sflag [#allocation6], %s232
        %s234 = sand.u32 %s109, 1
        %s235 = smul.addr %s234, 8
        %s236 = scalar_lea.vmem [#allocation5], %s235
        // Predicated region
        $region37: #{tpu_custom_call.1} parent=35 // pred_check
          %p237 = pneg %p122
        $region38: #{tpu_custom_call.1} parent=35 // pred_check_branch
          %239 = sbr.rel (%p237) target = $region40
        $region39: #{tpu_custom_call.1} parent=35 // pred_region
          %240 = dma.done %s233, 128
        $region40: #{tpu_custom_call.1} parent=35 // pred_fallthru
          _
        %p241 = pneg %p54
        %p242 = pneg %p51
        %p243 = pneg %p75
        %p244 = pneg %p72
        %p245 = pneg %p96
        %p246 = pneg %p93
        %s247 = sand.u32 %s109, 1
        %s248 = scalar_lea.sflag [#allocation6], %s247
        %s249 = sand.u32 %s109, 1
        %s250 = smul.addr %s249, 8
        %s251 = scalar_lea.vmem [#allocation5], %s250
        %p252 = pneg %p122
        %p253 = pneg %p119
        %p254 = pneg %p150
        %p255 = pneg %p147
        %s256 = sand.u32 %s137, 1
        %s257 = scalar_lea.sflag [#allocation7], %s256
        %s258 = sand.u32 %s137, 1
        %s259 = scalar_lea.vmem [#allocation8], %s258
        %p260 = pneg %p178
        %p261 = pneg %p175
        %s262 = sand.u32 %s165, 1
        %s263 = scalar_lea.sflag [#allocation10], %s262
        %s264 = sand.u32 %s165, 1
        %s265 = smul.addr %s264, 2
        %s266 = scalar_lea.vmem [#allocation9], %s265
        %s267 = smul.u32 %s31, %s30
        %s268 = smul.u32 %s31, %s30
        %p269 = scmp.eq.s32.totalorder %s30, 0
        %p270 = scmp.eq.s32.totalorder %s31, 0
        %p271 = pnand %p269, %p270
        %p272 = pneg %p271
        // Predicated region
        $region41: #{tpu_custom_call.1} parent=35 // pred_check
          _
        $region42: #{tpu_custom_call.1} parent=35 // pred_check_branch
          %274 = sbr.rel (%p271) target = $region44
        $region43: #{tpu_custom_call.1} parent=35 // pred_region
          %vm275 = vcmask 0
          %276 = vst.msk [vmem:[#allocation3] sm:$0x1] %vm275, 0.0
          %277 = vst.msk [vmem:[#allocation4] sm:$0x1] %vm275, 0.0
        $region44: #{tpu_custom_call.1} parent=35 // pred_fallthru
          _
        // Predicated region
        $region45: #{tpu_custom_call.1} parent=35 // pred_check
          %p278 = pneg %p269
        $region46: #{tpu_custom_call.1} parent=35 // pred_check_branch
          %280 = sbr.rel (%p278) target = $region48
        $region47: #{tpu_custom_call.1} parent=35 // pred_region
          %v281 = vld [vmem:[%s236] sm:$0xff]
          %v282 = vld [vmem:[%s0] sm:$0xff]
          %v283 = vld [vmem:[%s0 + $0x8] sm:$0x1]
          %v285 = vcombine.high %v281, %v281
          %vm286 = vcmask 31744
          %v288 = vsel %vm286, %v282, 0
          %v291 = vsel %vm286, %v283, 0
          %vm293 = vcmask 1043456
          %v294 = vsel %vm293, %v281, 0
          %v296 = vsel %vm293, %v285, 0
          %298 = vmatprep.subr.mxu0 0.0
          %299 = vmatpush1.msra.mxu0 0.0
          %300 = vmatprep.subr.mxu0 0.0
          %301 = vmatpush1.msra.mxu0 0.0
          %302 = vmatprep.subr.mxu0 0.0
          %303 = vmatpush1.msra.mxu0 0.0
          %304 = vmatprep.subr.mxu0 0.0
          %305 = vmatpush1.msra.mxu0 0.0
          %306 = vmatprep.subr.mxu0 0.0
          %307 = vmatpush1.msra.mxu0 0.0
          %308 = vmatprep.subr.mxu0 0.0
          %309 = vmatpush1.msra.mxu0 0.0
          %310 = vmatprep.subr.mxu0 0.0
          %311 = vmatpush1.msra.mxu0 0.0
          %312 = vmatprep.subr.mxu0 0.0
          %313 = vmatpush1.msra.mxu0 0.0
          %314 = vmatprep.subr.mxu0 0.0
          %315 = vmatpush1.msra.mxu0 0.0
          %316 = vmatprep.subr.mxu0 0.0
          %317 = vmatpush1.msra.mxu0 0.0
          %318 = vmatprep.subr.mxu0 0.0
          %319 = vmatpush1.msra.mxu0 0.0
          %320 = vmatprep.subr.mxu0 0.0
          %321 = vmatpush1.msra.mxu0 0.0
          %322 = vmatprep.subr.mxu0 0.0
          %323 = vmatpush1.msra.mxu0 0.0
          %324 = vmatprep.subr.mxu0 0.0
          %325 = vmatpush1.msra.mxu0 0.0
          %326 = vmatprep.subr.mxu0 0.0
          %327 = vmatpush1.msra.mxu0 0.0
          %328 = vmatprep.subr.mxu0 %v296
          %329 = vmatpush1.msra.mxu0 %v294
          %330 = vmatprep.subr.mxu0 0.0
          %331 = vmatpush2.msra.mxu0 0.0
          %332 = vmatprep.subr.mxu0 0.0
          %333 = vmatpush2.msra.mxu0 0.0
          %334 = vmatprep.subr.mxu0 0.0
          %335 = vmatpush2.msra.mxu0 0.0
          %336 = vmatprep.subr.mxu0 0.0
          %337 = vmatpush2.msra.mxu0 0.0
          %338 = vmatprep.subr.mxu0 0.0
          %339 = vmatpush2.msra.mxu0 0.0
          %340 = vmatprep.subr.mxu0 0.0
          %341 = vmatpush2.msra.mxu0 0.0
          %342 = vmatprep.subr.mxu0 0.0
          %343 = vmatpush2.msra.mxu0 0.0
          %344 = vmatprep.subr.mxu0 0.0
          %345 = vmatpush2.msra.mxu0 0.0
          %346 = vmatprep.subr.mxu0 0.0
          %347 = vmatpush2.msra.mxu0 0.0
          %348 = vmatprep.subr.mxu0 0.0
          %349 = vmatpush2.msra.mxu0 0.0
          %350 = vmatprep.subr.mxu0 0.0
          %351 = vmatpush2.msra.mxu0 0.0
          %352 = vmatprep.subr.mxu0 0.0
          %353 = vmatpush2.msra.mxu0 0.0
          %354 = vmatprep.subr.mxu0 0.0
          %355 = vmatpush2.msra.mxu0 0.0
          %356 = vmatprep.subr.mxu0 0.0
          %357 = vmatpush2.msra.mxu0 0.0
          %358 = vmatprep.subr.mxu0 0.0
          %359 = vmatpush2.msra.mxu0 0.0
          %360 = vmatprep.subr.mxu0 0.0
          %361 = vmatpush2.msra.mxu0 0.0
          %362 = vmatprep.mubr.f32.mxu0 0.0
          %363 = vmatmul.mubr.f32.gmra.mxu0 %v288
          %v364 = vpop.f32.mrf.mxu0
          %v365 = vadd.f32 0.0, %v364
          %v366 = vpop.f32.mrf.mxu0
          %v367 = vadd.f32 0.0, %v366
          %368 = vmatprep.mubr.f32.mxu0 0.0
          %369 = vmatmul.mubr.f32.gmra.mxu0 %v291
          %v370 = vpop.f32.mrf.mxu0
          %v371 = vadd.f32 0.0, %v370
          %v372 = vpop.f32.mrf.mxu0
          %v373 = vadd.f32 0.0, %v372
          %374 = vdwg.mxu0
          %v375 = vld [vmem:[%s1] sm:$0xff]
          %v376 = vld [vmem:[%s1 + $0x8] sm:$0xff]
          %377 = vrot.lane.b32.xlu0 %v365, 17
          %v378 = vpop.permute.xlu0 %377
          %379 = vrot.lane.b32.xlu0 %v367, 17
          %v380 = vpop.permute.xlu0 %379
          %v381 = vlaneseq
          %v382 = vand.u32 %v381, 127
          %vm383 = vcmp.lt.s32.totalorder %v382, 17
          %v384 = vsel %vm383, %v378, %v380
          %v385 = vsel %vm383, %v380, %v378
          %v386 = vmul.f32 %v385, %v375
          %v387 = vmul.f32 %v384, %v376
          %v390 = vrot.slane %v386, 4
          %v391 = vrot.slane %v387, 4
          %v394 = vadd.f32 %v365, %v390
          %v395 = vadd.f32 %v367, %v391
          %v398 = vrot.slane %v365, 1
          %v399 = vrot.slane %v367, 1
          %402 = vrot.lane.b32.xlu0 %v398, 16
          %v403 = vpop.permute.xlu0 %402
          %404 = vrot.lane.b32.xlu0 %v399, 16
          %v405 = vpop.permute.xlu0 %404
          %vm406 = vcmp.lt.s32.totalorder %v382, 16
          %v407 = vsel %vm406, %v403, %v405
          %v408 = vsel %vm406, %v405, %v403
          %v411 = vrot.slane %v375, 1
          %v412 = vrot.slane %v376, 1
          %v415 = vmul.f32 %v408, %v411
          %v416 = vmul.f32 %v407, %v412
          %v419 = vrot.slane %v415, 4
          %v420 = vrot.slane %v416, 4
          %v423 = vadd.f32 %v394, %v419
          %v424 = vadd.f32 %v395, %v420
          %v425 = vrot.slane %v365, 2
          %v426 = vrot.slane %v367, 2
          %429 = vrot.lane.b32.xlu0 %v425, 15
          %v430 = vpop.permute.xlu0 %429
          %431 = vrot.lane.b32.xlu0 %v426, 15
          %v432 = vpop.permute.xlu0 %431
          %vm433 = vcmp.lt.s32.totalorder %v382, 15
          %v434 = vsel %vm433, %v430, %v432
          %v435 = vsel %vm433, %v432, %v430
          %v436 = vrot.slane %v375, 2
          %v437 = vrot.slane %v376, 2
          %v440 = vmul.f32 %v435, %v436
          %v441 = vmul.f32 %v434, %v437
          %v444 = vrot.slane %v440, 4
          %v445 = vrot.slane %v441, 4
          %v448 = vadd.f32 %v423, %v444
          %v449 = vadd.f32 %v424, %v445
          %v450 = vrot.slane %v365, 3
          %v451 = vrot.slane %v367, 3
          %454 = vrot.lane.b32.xlu0 %v450, 1
          %v455 = vpop.permute.xlu0 %454
          %456 = vrot.lane.b32.xlu0 %v451, 1
          %v457 = vpop.permute.xlu0 %456
          %vm458 = vcmp.lt.s32.totalorder %v382, 1
          %v459 = vsel %vm458, %v455, %v457
          %v460 = vsel %vm458, %v457, %v455
          %v461 = vrot.slane %v375, 3
          %v462 = vrot.slane %v376, 3
          %v465 = vmul.f32 %v460, %v461
          %v466 = vmul.f32 %v459, %v462
          %v469 = vrot.slane %v465, 4
          %v470 = vrot.slane %v466, 4
          %v473 = vadd.f32 %v448, %v469
          %v474 = vadd.f32 %v449, %v470
          %v475 = vrot.slane %v365, 5
          %v476 = vrot.slane %v367, 5
          %479 = vrot.lane.b32.xlu0 %v475, 127
          %v480 = vpop.permute.xlu0 %479
          %481 = vrot.lane.b32.xlu0 %v476, 127
          %v482 = vpop.permute.xlu0 %481
          %vm483 = vcmp.lt.s32.totalorder %v382, 127
          %v484 = vsel %vm483, %v480, %v482
          %v485 = vsel %vm483, %v482, %v480
          %v486 = vrot.slane %v375, 4
          %v487 = vrot.slane %v376, 4
          %v490 = vmul.f32 %v484, %v486
          %v491 = vmul.f32 %v485, %v487
          %v494 = vrot.slane %v490, 4
          %v495 = vrot.slane %v491, 4
          %v498 = vadd.f32 %v473, %v494
          %v499 = vadd.f32 %v474, %v495
          %v500 = vrot.slane %v365, 6
          %v501 = vrot.slane %v367, 6
          %504 = vrot.lane.b32.xlu0 %v500, 113
          %v505 = vpop.permute.xlu0 %504
          %506 = vrot.lane.b32.xlu0 %v501, 113
          %v507 = vpop.permute.xlu0 %506
          %vm508 = vcmp.lt.s32.totalorder %v382, 113
          %v509 = vsel %vm508, %v505, %v507
          %v510 = vsel %vm508, %v507, %v505
          %v511 = vrot.slane %v375, 5
          %v512 = vrot.slane %v376, 5
          %v515 = vmul.f32 %v509, %v511
          %v516 = vmul.f32 %v510, %v512
          %v519 = vrot.slane %v515, 4
          %v520 = vrot.slane %v516, 4
          %v523 = vadd.f32 %v498, %v519
          %v524 = vadd.f32 %v499, %v520
          %v525 = vrot.slane %v365, 7
          %v526 = vrot.slane %v367, 7
          %529 = vrot.lane.b32.xlu0 %v525, 112
          %v530 = vpop.permute.xlu0 %529
          %531 = vrot.lane.b32.xlu0 %v526, 112
          %v532 = vpop.permute.xlu0 %531
          %vm533 = vcmp.lt.s32.totalorder %v382, 112
          %v534 = vsel %vm533, %v530, %v532
          %v535 = vsel %vm533, %v532, %v530
          %v536 = vrot.slane %v375, 6
          %v537 = vrot.slane %v376, 6
          %v540 = vmul.f32 %v534, %v536
          %v541 = vmul.f32 %v535, %v537
          %v544 = vrot.slane %v540, 4
          %v545 = vrot.slane %v541, 4
          %v548 = vadd.f32 %v523, %v544
          %v549 = vadd.f32 %v524, %v545
          %550 = vrot.lane.b32.xlu0 %v371, 111
          %v551 = vpop.permute.xlu0 %550
          %552 = vrot.lane.b32.xlu0 %v373, 111
          %v553 = vpop.permute.xlu0 %552
          %vm554 = vcmp.lt.s32.totalorder %v382, 111
          %v555 = vsel %vm554, %v551, %v553
          %v556 = vsel %vm554, %v553, %v551
          %v557 = vrot.slane %v375, 7
          %v558 = vrot.slane %v376, 7
          %v561 = vmul.f32 %v555, %v557
          %v562 = vmul.f32 %v556, %v558
          %v565 = vrot.slane %v561, 4
          %v566 = vrot.slane %v562, 4
          %v569 = vadd.f32 %v548, %v565
          %v570 = vadd.f32 %v549, %v566
          %v573 = vcombine.high %v569, %v570
          %v575 = vunpack.c.l.s4 1966171168
          %v576 = vunpack.c.0.s8 %v575
          %v577 = vlaneseq
          %v578 = vshrl.u32 %v577, 7
          %v579 = vsub.s32 %v576, %v578
          %v580 = vrot.slane %v573, %v579
          %v582 = vunpack.c.l.s4 1966171168
          %v583 = vunpack.c.0.s8 %v582
          %v584 = vlaneseq
          %v585 = vshrl.u32 %v584, 7
          %v586 = vsub.s32 %v583, %v585
          %v587 = vrot.slane %v580, %v586
          %v589 = vlaneseq
          %vm590 = vcmp.ge.s32.totalorder %v589, 0
          %vm591 = vcmp.lt.s32.totalorder %v589, 256
          %vm592 = vmand %vm590, %vm591
          %s593 = sshra.s32 %s31, 1
          %s594 = sand.u32 %s31, 1
          %s595 = sshra.s32 %s31, 1
          %s596 = sand.u32 %s31, 1
          %s597 = smul.u32 %s593, 2
          %s598 = smul.u32 %s597, 2
          %s599 = sadd.s32 %s598, %s596
          %s600 = scalar_lea.vmem [#allocation2], %s599
          %601 = vst.msk [vmem:[%s600] ss:$2 sm:$0x3] %vm592, %v587
          %v602 = vld [vmem:[#allocation3] sm:$0x1]
          %v603 = vrot.slane %v569, 4
          %v604 = vrot.slane %v570, 4
          %vm607 = vcmask 1040384
          %v608 = vsel %vm607, %v603, 0.0
          %v609 = vsel %vm607, %v604, 0.0
          %v610 = vadd.f32 %v608, %v609
          %611 = vadd.xlane.f32.xlu0 %v610
          %v612 = vpop.xlane.xlu0 %611
          %v613 = vrot.slane %v612, 4
          %v614 = vadd.f32 %v612, %v613
          %v615 = vrot.slane %v614, 2
          %v616 = vadd.f32 %v614, %v615
          %v617 = vrot.slane %v616, 1
          %v618 = vadd.f32 %v616, %v617
          %s619 = vtos %v618
          %v620 = vstv %s619
          %v621 = vadd.f32 %v602, %v620
          %vm622 = vcmask 0
          %623 = vst.msk [vmem:[#allocation3] sm:$0x1] %vm622, %v621
          %v624 = vld [vmem:[#allocation4] sm:$0x1]
          %v625 = vmul.f32 %v569, %v569
          %v626 = vmul.f32 %v570, %v570
          %v629 = vrot.slane %v625, 4
          %v630 = vrot.slane %v626, 4
          %v633 = vsel %vm607, %v629, 0.0
          %v634 = vsel %vm607, %v630, 0.0
          %v635 = vadd.f32 %v633, %v634
          %636 = vadd.xlane.f32.xlu0 %v635
          %v637 = vpop.xlane.xlu0 %636
          %v638 = vrot.slane %v637, 4
          %v639 = vadd.f32 %v637, %v638
          %v640 = vrot.slane %v639, 2
          %v641 = vadd.f32 %v639, %v640
          %v642 = vrot.slane %v641, 1
          %v643 = vadd.f32 %v641, %v642
          %s644 = vtos %v643
          %v645 = vstv %s644
          %v646 = vadd.f32 %v624, %v645
          %647 = vst.msk [vmem:[#allocation4] sm:$0x1] %vm622, %v646
        $region48: #{tpu_custom_call.1} parent=35 // pred_fallthru
          _
        %p648 = scmp.eq.s32.totalorder %s30, 1
        // Predicated region
        $region49: #{tpu_custom_call.1} parent=35 // pred_check
          %p649 = pneg %p648
        $region50: #{tpu_custom_call.1} parent=35 // pred_check_branch
          %651 = sbr.rel (%p649) target = $region52
        $region51: #{tpu_custom_call.1} parent=35 // pred_region
          %v652 = vld [vmem:[#allocation3] sm:$0x1]
          %v653 = vmul.f32 %v652, 0.001953125
          %v654 = vld [vmem:[#allocation4] sm:$0x1]
          %v655 = vmul.f32 %v654, 0.001953125
          %v656 = vmul.f32 %v653, %v653
          %v657 = vsub.f32 %v655, %v656
          %v658 = vld [vmem:[%s2] sm:$0x1]
          %v659 = vadd.f32 %v657, 1e-05
          %v660 = vrsqrt.pop %v659
          %v661 = vmul.f32 %v660, %v658
          %s662 = sshra.s32 %s31, 1
          %s663 = sand.u32 %s31, 1
          %s664 = sshra.s32 %s31, 1
          %s665 = sand.u32 %s31, 1
          %s666 = smul.u32 %s662, 2
          %s667 = smul.u32 %s666, 2
          %s668 = sadd.s32 %s667, %s665
          %s669 = scalar_lea.vmem [#allocation2], %s668
          %v670 = vld [vmem:[%s669] ss:$2 sm:$0x3]
          %672 = vset.pattern.permute.xlu0 0
          %673 = vperm.xlu0 %672, %v653
          %v674 = vpop.permute.xlu0 %673
          %v676 = vlaneseq
          %v677 = vshrl.u32 %v676, 7
          %v678 = vsub.s32 0, %v677
          %v679 = vrot.slane %v674, %v678
          %v680 = vsub.f32 %v670, %v679
          %682 = vset.pattern.permute.xlu0 0
          %683 = vperm.xlu0 %682, %v661
          %v684 = vpop.permute.xlu0 %683
          %v686 = vlaneseq
          %v687 = vshrl.u32 %v686, 7
          %v688 = vsub.s32 0, %v687
          %v689 = vrot.slane %v684, %v688
          %v690 = vmul.f32 %v680, %v689
          %692 = vset.pattern.permute.xlu0 1
          %693 = vperm.xlu0 %692, %v658
          %v694 = vpop.permute.xlu0 %693
          %v696 = vlaneseq
          %v697 = vshrl.u32 %v696, 7
          %v698 = vsub.s32 0, %v697
          %v699 = vrot.slane %v694, %v698
          %v700 = vadd.f32 %v690, %v699
          %v701 = vxor.u32 %v700, 2147483648
          %v702 = vmul.f32 %v701, 1.442695
          %v703 = vpow.pop %v702
          %v704 = vadd.f32 %v703, 1.0
          %v705 = vrcp.pop %v704
          %v706 = vmul.f32 1.0, %v705
          %v707 = vlaneseq
          %vm708 = vcmp.ge.s32.totalorder %v707, 0
          %vm709 = vcmp.lt.s32.totalorder %v707, 256
          %vm710 = vmand %vm708, %vm709
          %711 = vst.msk [vmem:[%s266] sm:$0x3] %vm710, %v706
          %v712 = vld [vmem:[%s236] sm:$0xff]
          %v714 = vlaneseq
          %v715 = vshrl.u32 %v714, 7
          %v716 = vsub.s32 0, %v715
          %v717 = vrot.slane %v706, %v716
          %v718 = vlaneseq
          %v719 = vshrl.u32 %v718, 7
          %v720 = vsub.s32 1, %v719
          %v721 = vrot.slane %v706, %v720
          %vm724 = vcmask 1040384
          %v725 = vsel %vm724, %v717, 1.0
          %v726 = vsel %vm724, %v721, 1.0
          %v728 = vcombine.high %v712, %v712
          %730 = vmatprep.subr.mxu0 0.0
          %731 = vmatpush1.xpose.msra.mxu0 0.0
          %732 = vmatprep.subr.mxu0 0.0
          %733 = vmatpush1.xpose.msra.mxu0 0.0
          %734 = vmatprep.subr.mxu0 0.0
          %735 = vmatpush1.xpose.msra.mxu0 0.0
          %736 = vmatprep.subr.mxu0 0.0
          %737 = vmatpush1.xpose.msra.mxu0 0.0
          %738 = vmatprep.subr.mxu0 0.0
          %739 = vmatpush1.xpose.msra.mxu0 0.0
          %740 = vmatprep.subr.mxu0 0.0
          %741 = vmatpush1.xpose.msra.mxu0 0.0
          %742 = vmatprep.subr.mxu0 0.0
          %743 = vmatpush1.xpose.msra.mxu0 0.0
          %744 = vmatprep.subr.mxu0 0.0
          %745 = vmatpush1.xpose.msra.mxu0 0.0
          %746 = vmatprep.subr.mxu0 0.0
          %747 = vmatpush1.xpose.msra.mxu0 0.0
          %748 = vmatprep.subr.mxu0 0.0
          %749 = vmatpush1.xpose.msra.mxu0 0.0
          %750 = vmatprep.subr.mxu0 0.0
          %751 = vmatpush1.xpose.msra.mxu0 0.0
          %752 = vmatprep.subr.mxu0 0.0
          %753 = vmatpush1.xpose.msra.mxu0 0.0
          %754 = vmatprep.subr.mxu0 0.0
          %755 = vmatpush1.xpose.msra.mxu0 0.0
          %756 = vmatprep.subr.mxu0 0.0
          %757 = vmatpush1.xpose.msra.mxu0 0.0
          %758 = vmatprep.subr.mxu0 0.0
          %759 = vmatpush1.xpose.msra.mxu0 0.0
          %760 = vmatprep.subr.mxu0 %v728
          %761 = vmatpush1.xpose.msra.mxu0 %v712
          %762 = vmatprep.subr.mxu0 0.0
          %763 = vmatpush2.xpose.msra.mxu0 0.0
          %764 = vmatprep.subr.mxu0 0.0
          %765 = vmatpush2.xpose.msra.mxu0 0.0
          %766 = vmatprep.subr.mxu0 0.0
          %767 = vmatpush2.xpose.msra.mxu0 0.0
          %768 = vmatprep.subr.mxu0 0.0
          %769 = vmatpush2.xpose.msra.mxu0 0.0
          %770 = vmatprep.subr.mxu0 0.0
          %771 = vmatpush2.xpose.msra.mxu0 0.0
          %772 = vmatprep.subr.mxu0 0.0
          %773 = vmatpush2.xpose.msra.mxu0 0.0
          %774 = vmatprep.subr.mxu0 0.0
          %775 = vmatpush2.xpose.msra.mxu0 0.0
          %776 = vmatprep.subr.mxu0 0.0
          %777 = vmatpush2.xpose.msra.mxu0 0.0
          %778 = vmatprep.subr.mxu0 0.0
          %779 = vmatpush2.xpose.msra.mxu0 0.0
          %780 = vmatprep.subr.mxu0 0.0
          %781 = vmatpush2.xpose.msra.mxu0 0.0
          %782 = vmatprep.subr.mxu0 0.0
          %783 = vmatpush2.xpose.msra.mxu0 0.0
          %784 = vmatprep.subr.mxu0 0.0
          %785 = vmatpush2.xpose.msra.mxu0 0.0
          %786 = vmatprep.subr.mxu0 0.0
          %787 = vmatpush2.xpose.msra.mxu0 0.0
          %788 = vmatprep.subr.mxu0 0.0
          %789 = vmatpush2.xpose.msra.mxu0 0.0
          %790 = vmatprep.subr.mxu0 0.0
          %791 = vmatpush2.xpose.msra.mxu0 0.0
          %792 = vmatprep.subr.mxu0 0.0
          %793 = vmatpush2.xpose.msra.mxu0 0.0
          %794 = vmatprep.mubr.f32.mxu0 %v726
          %795 = vmatmul.mubr.f32.gmra.mxu0 %v725
          %v796 = vpop.f32.mrf.mxu0
          %v797 = vadd.f32 0.0, %v796
          %v798 = vpop.f32.mrf.mxu0
          %799 = vdwg.mxu0
          %v800 = vmul.f32 %v797, 0.00390625
          %v802 = vrot.slane %v797, 7
          %v804 = vsub.f32 %v797, %v802
          %v805 = vmul.f32 %v804, 0.00390625
          %v807 = vrot.slane %v805, 1
          %808 = vrot.lane.b32.xlu0 %v807, 4
          %v809 = vpop.permute.xlu0 %808
          %vm811 = vcmask 31744
          %v812 = vsel %vm811, %v800, %v809
          %vm813 = vcmask 57344
          %814 = vst.msk [vmem:[%s259] sm:$0x1] %vm813, %v812
        $region52: #{tpu_custom_call.1} parent=35 // pred_fallthru
          _
        %s815 = sand.u32 %s137, 1
        %s816 = scalar_lea.sflag [#allocation7], %s815
        %s817 = sand.u32 %s137, 1
        %s818 = scalar_lea.vmem [#allocation8], %s817
        %s819 = sand.u32 %s165, 1
        %s820 = scalar_lea.sflag [#allocation10], %s819
        %s821 = sand.u32 %s165, 1
        %s822 = smul.addr %s821, 2
        %s823 = scalar_lea.vmem [#allocation9], %s822
        // Predicated region
        $region53: #{tpu_custom_call.1} parent=35 // pred_check
          %p824 = pneg %p147
        $region54: #{tpu_custom_call.1} parent=35 // pred_check_branch
          %826 = sbr.rel (%p824) target = $region56
        $region55: #{tpu_custom_call.1} parent=35 // pred_region
          %s827 = smul.u32 %s31, %s30
          %s829 = ssub.s32 16, 16
          %830 = vsyncadd %s816, %s829
          %s831 = smul.addr %s827, 16
          %s832 = scalar_lea.hbm %s4, %s831
          %s834 = sshll.u32 %s818, 4
          %s835 = int_to_ptr.vmem [resolvable:$true] %s834
          %837 = dma.vmem_to_hbm [thread:$0]  %s835, 16, %s832, %s816
        $region56: #{tpu_custom_call.1} parent=35 // pred_fallthru
          _
        // Predicated region
        $region57: #{tpu_custom_call.1} parent=35 // pred_check
          %p838 = pneg %p175
        $region58: #{tpu_custom_call.1} parent=35 // pred_check_branch
          %840 = sbr.rel (%p838) target = $region60
        $region59: #{tpu_custom_call.1} parent=35 // pred_region
          %s841 = smul.u32 %s31, %s30
          %s843 = ssub.s32 32, 32
          %844 = vsyncadd %s820, %s843
          %s845 = smul.addr %s841, 2
          %s846 = smul.addr %s845, 16
          %s847 = scalar_lea.hbm %s5, %s846
          %s849 = sshll.u32 %s823, 4
          %s850 = int_to_ptr.vmem [resolvable:$true] %s849
          %852 = dma.vmem_to_hbm [thread:$0]  %s850, 32, %s847, %s820
        $region60: #{tpu_custom_call.1} parent=35 // pred_fallthru
          _
      $region36: #{tpu_custom_call.1} parent=5 // pred_fallthru
        _
      %p853 = scmp.le.s32.totalorder 2, %s21
      // Predicated region
      $region61: #{tpu_custom_call.1} parent=5 // pred_check
        %p854 = pneg %p853
      $region62: #{tpu_custom_call.1} parent=5 // pred_check_branch
        %856 = sbr.rel (%p854) target = $region64
      $region63: #{tpu_custom_call.1} parent=5 // pred_region
        %s857 = ssub.s32 %s21, 2
        // Predicated region
        $region65: #{tpu_custom_call.1} parent=63 // pred_check
          %p858 = pneg %p153
        $region66: #{tpu_custom_call.1} parent=63 // pred_check_branch
          %860 = sbr.rel (%p858) target = $region68
        $region67: #{tpu_custom_call.1} parent=63 // pred_region
          %s861 = sand.u32 %s138, 1
          %s862 = scalar_lea.sflag [#allocation7], %s861
          %s863 = sand.u32 %s138, 1
          %s864 = scalar_lea.vmem [#allocation8], %s863
          %865 = dma.done %s862, 16
        $region68: #{tpu_custom_call.1} parent=63 // pred_fallthru
          _
        // Predicated region
        $region69: #{tpu_custom_call.1} parent=63 // pred_check
          %p866 = pneg %p181
        $region70: #{tpu_custom_call.1} parent=63 // pred_check_branch
          %868 = sbr.rel (%p866) target = $region72
        $region71: #{tpu_custom_call.1} parent=63 // pred_region
          %s869 = sand.u32 %s166, 1
          %s870 = scalar_lea.sflag [#allocation10], %s869
          %s871 = sand.u32 %s166, 1
          %s872 = smul.addr %s871, 2
          %s873 = scalar_lea.vmem [#allocation9], %s872
          %874 = dma.done %s870, 32
        $region72: #{tpu_custom_call.1} parent=63 // pred_fallthru
          _
      $region64: #{tpu_custom_call.1} parent=5 // pred_fallthru
        _
    $region6: #{tpu_custom_call.1} parent=1 // loop_footer
      %s25 = sadd.s32 1, %s21
    $region7: #{tpu_custom_call.1} parent=1 // loop_footer_branch
      %20 = sbr.rel target = $region3
    $region8: #{tpu_custom_call.1} parent=1 // loop_exit
      _
    %875 = vsyncpa [#allocation6], 1
    %s876 = scalar_lea.sflag [#allocation6], 1
    %877 = vsyncpa %s876, 1
    %878 = vsyncpa [#allocation7], 1
    %s879 = scalar_lea.sflag [#allocation7], 1
    %880 = vsyncpa %s879, 1
    %881 = vsyncpa [#allocation10], 1
    %s882 = scalar_lea.sflag [#allocation10], 1
    %883 = vsyncpa %s882, 1

</llo_original>
